<compile_context>
chip_gen: v5e
topology: v5e:2x2
jax: 0.10.0
libtpu: 0.0.40
codegen_flags: <defaults>
</compile_context>

<pallas_src>
import functools

import jax
import jax.numpy as jnp
from jax import lax
from jax.experimental import pallas as pl
from jax.experimental.pallas import tpu as pltpu


def _round_up(a, b):
    return ((a + b - 1) // b) * b


def _vmem_capacity_bytes():
    try:
        cap = getattr(pltpu.get_tpu_info(), "vmem_capacity_bytes", None)
        if cap:
            return int(cap)
    except Exception:
        pass
    return 64 * 1024 * 1024  # conservative default (v7x per-TC physical VMEM)


def _batch_kernel(x_ref, y_ref, o_ref, *, hw, eps):
    """x_ref, y_ref: (TN, C, hw) -- TN whole images.  o_ref: (TN, 1, 1)."""
    x = x_ref[...].astype(jnp.float32)
    y = y_ref[...].astype(jnp.float32)
    dot = jnp.sum(x * y, axis=1, keepdims=True)          # (TN, 1, hw)
    nx2 = jnp.sum(x * x, axis=1, keepdims=True)
    ny2 = jnp.sum(y * y, axis=1, keepdims=True)
    cos = dot * lax.rsqrt(jnp.maximum(nx2 * ny2, jnp.float32(eps * eps)))
    # per-image sum of (1 - cos) over hw pixels == hw - sum(cos)
    o_ref[...] = jnp.float32(hw) - jnp.sum(cos, axis=2, keepdims=True)


def _pixel_kernel(x_ref, y_ref, o_ref, *, hw, tile, split, eps):
    """x_ref, y_ref: (C, tile) lane tiles of one image(-part).

    o_ref: (1, 1) resident accumulator -- collects sum(cos) over this part's
    pixel tiles and is finalized to (#valid pixels - sum(cos)).
    """
    p = pl.program_id(0)
    jj = pl.program_id(1)
    num_jj = pl.num_programs(1)

    @pl.when(jj == 0)
    def _():
        o_ref[...] = jnp.zeros_like(o_ref)

    x = x_ref[...].astype(jnp.float32)                    # (C, tile)
    y = y_ref[...].astype(jnp.float32)
    dot = jnp.sum(x * y, axis=0, keepdims=True)           # (1, tile)
    nx2 = jnp.sum(x * x, axis=0, keepdims=True)
    ny2 = jnp.sum(y * y, axis=0, keepdims=True)
    cos = dot * lax.rsqrt(jnp.maximum(nx2 * ny2, jnp.float32(eps * eps)))

    if split > 1:
        s = p % split
        j_logical = s * num_jj + jj
    else:
        s = 0
        j_logical = jj
    start = j_logical * tile

    if (hw % tile) != 0 or split > 1:
        # Full tiles accumulate with no iota/where; only boundary / overhang
        # tiles pay for the mask.
        @pl.when(start + tile <= hw)
        def _():
            o_ref[...] += jnp.sum(cos, axis=1, keepdims=True)

        @pl.when(start + tile > hw)
        def _():
            col = start + lax.broadcasted_iota(jnp.int32, (1, tile), 1)
            o_ref[...] += jnp.sum(jnp.where(col < hw, cos, 0.0),
                                  axis=1, keepdims=True)
    else:
        o_ref[...] += jnp.sum(cos, axis=1, keepdims=True)

    @pl.when(jj == num_jj - 1)
    def _():
        if split > 1:
            part_start = s * num_jj * tile
            valid = jnp.clip(hw - part_start, 0, num_jj * tile).astype(jnp.float32)
        else:
            valid = jnp.float32(hw)
        o_ref[...] = valid - o_ref[...]


def cosine_reconstruct(x, y, *, eps=1e-8, vmem_budget_bytes=None):
    """x, y: (N, C, ...) arrays. Returns scalar mean(1 - cosine_sim over dim 1)."""
    assert x.shape == y.shape and x.ndim >= 2
    N, C = int(x.shape[0]), int(x.shape[1])
    hw = 1
    for d in x.shape[2:]:
        hw *= int(d)
    total = N * hw

    # Free contiguous views: NCHW -> (N, C, H*W).
    x3 = x.reshape(N, C, hw)
    y3 = y.reshape(N, C, hw)

    itemsize = jnp.dtype(x.dtype).itemsize
    pack = max(8, 32 // itemsize)              # sublane packing: f32:8 bf16:16 int8:32
    c_pad = _round_up(C, pack)
    hw_pad = _round_up(hw, 128)

    cap = _vmem_capacity_bytes()
    if vmem_budget_bytes is None:
        # Generation-aware: input double-buffers get ~1/8 of physical VMEM,
        # leaving headroom for pipeline copies and compute temporaries.
        vmem_budget_bytes = cap // 8
    budget = int(vmem_budget_bytes)
    limit_cap = int(0.7 * cap)                  # ~45 MiB on v7x, ~90 MiB on v5e/v6e

    def _vmem_limit(in_block_bytes):
        # 2 inputs x 2 pipeline buffers + ~6 block-sized f32 temporaries + slack.
        f32_block = (in_block_bytes // itemsize) * 4
        needed = 4 * in_block_bytes + 6 * f32_block + (2 << 20)
        return int(min(limit_cap, max(needed, 16 << 20)))

    bytes_per_image = c_pad * hw_pad * itemsize            # one input, one buffer
    tn_cap = budget // (4 * bytes_per_image)                # 2 inputs x 2 buffers

    if N >= 2 and tn_cap >= 1:
        # ---------------- Path B: whole images per block ----------------
        tn = 1
        for t in range(min(tn_cap, N), 0, -1):
            if N % t == 0:
                tn = t
                break
        kernel = functools.partial(_batch_kernel, hw=hw, eps=eps)
        partials = pl.pallas_call(
            kernel,
            out_shape=jax.ShapeDtypeStruct((N, 1, 1), jnp.float32),
            grid_spec=pltpu.PrefetchScalarGridSpec(
                num_scalar_prefetch=0,
                grid=(N // tn,),
                in_specs=[
                    pl.BlockSpec((tn, C, hw), lambda b: (b, 0, 0)),
                    pl.BlockSpec((tn, C, hw), lambda b: (b, 0, 0)),
                ],
                out_specs=pl.BlockSpec((tn, 1, 1), lambda b: (b, 0, 0)),
            ),
            compiler_params=pltpu.CompilerParams(
                dimension_semantics=("parallel",),
                vmem_limit_bytes=_vmem_limit(tn * bytes_per_image),
            ),
        )(x3, y3)
        return jnp.sum(partials) / total

    # ---------------- Path A: pixel tiling per image ----------------
    # Lane tile sized from the dtype-correct VMEM budget (2 inputs x 2 pipeline
    # buffers, sublane-padded C); capped only by the pixel extent.
    tile = budget // (4 * c_pad * itemsize)
    tile = max(tile, 128)
    # TODO(synk): add a C-blocking grid axis for very large C, where even a
    # 128-lane tile would exceed the scoped-VMEM limit.
    if tile >= hw_pad or hw <= 128:
        tile = hw                          # whole pixel row per block (always legal)
    else:
        tile = (tile // 128) * 128         # multiple of 128, strictly inside hw

    split = 1
    if N == 1 and hw > 128:
        # Keep both v7x TensorCores busy when N == 1: split the pixel axis into
        # two parallel parts (negligible extra cost on single-TC chips).
        half = _round_up(pl.cdiv(hw, 2), 128)
        if half < hw_pad:
            split = 2
            tile = min(tile, half)

    num_j = pl.cdiv(hw, tile)
    num_jj = pl.cdiv(num_j, split)

    def in_map(p, jj):
        j = (p % split) * num_jj + jj
        if split > 1:
            j = jnp.minimum(j, num_j - 1)   # overhang tiles are fully masked anyway
        return (p // split, 0, j)

    kernel = functools.partial(_pixel_kernel, hw=hw, tile=tile, split=split, eps=eps)
    partials = pl.pallas_call(
        kernel,
        out_shape=jax.ShapeDtypeStruct((N * split, 1, 1), jnp.float32),
        grid_spec=pltpu.PrefetchScalarGridSpec(
            num_scalar_prefetch=0,
            grid=(N * split, num_jj),
            in_specs=[
                pl.BlockSpec((None, C, tile), in_map),
                pl.BlockSpec((None, C, tile), in_map),
            ],
            out_specs=pl.BlockSpec((None, 1, 1), lambda p, jj: (p, 0, 0)),
        ),
        compiler_params=pltpu.CompilerParams(
            dimension_semantics=("parallel", "arbitrary"),
            vmem_limit_bytes=_vmem_limit(c_pad * tile * itemsize),
        ),
    )(x3, y3)
    return jnp.sum(partials) / total


def _reference(x, y, eps=1e-8):
    xf = x.astype(jnp.float32)
    yf = y.astype(jnp.float32)
    dot = jnp.sum(xf * yf, axis=1)
    nx = jnp.sqrt(jnp.sum(xf * xf, axis=1))
    ny = jnp.sqrt(jnp.sum(yf * yf, axis=1))
    cos = dot / jnp.maximum(nx * ny, eps)
    return jnp.mean(1.0 - cos)


if __name__ == "__main__":
    key = jax.random.PRNGKey(0)
    keys = jax.random.split(key, 8)

    # 1) Small NCHW (spec shape): batch-blocked path.
    x = jax.random.normal(keys[0], (2, 4, 16, 16), dtype=jnp.float32)
    y = jax.random.normal(keys[1], (2, 4, 16, 16), dtype=jnp.float32)
    out = jax.block_until_ready(cosine_reconstruct(x, y))
    ref = _reference(x, y)
    assert jnp.allclose(out, ref, atol=1e-5, rtol=1e-5), (out, ref)

    # 2) bf16 inputs: dtype-aware tile sizing, batch-blocked path.
    xb = jax.random.normal(keys[2], (2, 3, 16, 16), dtype=jnp.bfloat16)
    yb = jax.random.normal(keys[3], (2, 3, 16, 16), dtype=jnp.bfloat16)
    out = jax.block_until_ready(cosine_reconstruct(xb, yb))
    ref = _reference(xb, yb)
    assert jnp.allclose(out, ref, atol=1e-4, rtol=1e-4), (out, ref)

    # 3) Pixel-tiled path with a ragged last tile (tiny budget forces tiling).
    x = jax.random.normal(keys[4], (2, 4, 30, 30), dtype=jnp.float32)
    y = jax.random.normal(keys[5], (2, 4, 30, 30), dtype=jnp.float32)
    out = jax.block_until_ready(cosine_reconstruct(x, y, vmem_budget_bytes=64 * 1024))
    ref = _reference(x, y)
    assert jnp.allclose(out, ref, atol=1e-5, rtol=1e-5), (out, ref)

    # 4) N == 1: pixel axis split into 2 parallel parts (v7x dual-TC path).
    x = jax.random.normal(keys[6], (1, 4, 30, 30), dtype=jnp.float32)
    y = jax.random.normal(keys[7], (1, 4, 30, 30), dtype=jnp.float32)
    out = jax.block_until_ready(cosine_reconstruct(x, y, vmem_budget_bytes=64 * 1024))
    ref = _reference(x, y)
    assert jnp.allclose(out, ref, atol=1e-5, rtol=1e-5), (out, ref)

    print("KERNEL_OK")
</pallas_src>

<mosaic_0001>
module attributes {stable_mosaic.version = 11 : i64} {
  func.func @_batch_kernel(%arg0: i32, %arg1: memref<2x4x256xf32, #tpu.memory_space<vmem>>, %arg2: memref<2x4x256xf32, #tpu.memory_space<vmem>>, %arg3: memref<2x1x1xf32, #tpu.memory_space<vmem>>) attributes {dimension_semantics = [#tpu.dimension_semantics<parallel>], iteration_bounds = array<i64: 1>, scalar_prefetch = 0 : i64, scratch_operands = 0 : i64, tpu.core_type = #tpu.core_type<tc>, window_params = [{transform_indices = @transform_0, window_bounds = array<i64: 2, 4, 256>}, {transform_indices = @transform_1, window_bounds = array<i64: 2, 4, 256>}, {transform_indices = @transform_2, window_bounds = array<i64: 2, 1, 1>}]} {
    %c0 = arith.constant 0 : index
    %c0_0 = arith.constant 0 : index
    %c0_1 = arith.constant 0 : index
    %0 = vector.load %arg1[%c0, %c0_0, %c0_1] : memref<2x4x256xf32, #tpu.memory_space<vmem>>, vector<2x4x256xf32>
    %c0_2 = arith.constant 0 : index
    %c0_3 = arith.constant 0 : index
    %c0_4 = arith.constant 0 : index
    %1 = vector.load %arg2[%c0_2, %c0_3, %c0_4] : memref<2x4x256xf32, #tpu.memory_space<vmem>>, vector<2x4x256xf32>
    %2 = arith.mulf %0, %1 : vector<2x4x256xf32>
    %cst = arith.constant dense<0.000000e+00> : vector<2x256xf32>
    %3 = vector.multi_reduction <add>, %2, %cst [1] : vector<2x4x256xf32> to vector<2x256xf32>
    %4 = vector.shape_cast %3 : vector<2x256xf32> to vector<2x1x256xf32>
    %5 = arith.mulf %0, %0 : vector<2x4x256xf32>
    %cst_5 = arith.constant dense<0.000000e+00> : vector<2x256xf32>
    %6 = vector.multi_reduction <add>, %5, %cst_5 [1] : vector<2x4x256xf32> to vector<2x256xf32>
    %7 = vector.shape_cast %6 : vector<2x256xf32> to vector<2x1x256xf32>
    %8 = arith.mulf %1, %1 : vector<2x4x256xf32>
    %cst_6 = arith.constant dense<0.000000e+00> : vector<2x256xf32>
    %9 = vector.multi_reduction <add>, %8, %cst_6 [1] : vector<2x4x256xf32> to vector<2x256xf32>
    %10 = vector.shape_cast %9 : vector<2x256xf32> to vector<2x1x256xf32>
    %11 = arith.mulf %7, %10 : vector<2x1x256xf32>
    %cst_7 = arith.constant 1.000000e-16 : f32
    %12 = vector.broadcast %cst_7 : f32 to vector<2x1x256xf32>
    %13 = arith.maximumf %11, %12 : vector<2x1x256xf32>
    %14 = math.rsqrt %13 : vector<2x1x256xf32>
    %15 = arith.mulf %4, %14 : vector<2x1x256xf32>
    %cst_8 = arith.constant dense<0.000000e+00> : vector<2x1xf32>
    %16 = vector.multi_reduction <add>, %15, %cst_8 [2] : vector<2x1x256xf32> to vector<2x1xf32>
    %17 = vector.shape_cast %16 : vector<2x1xf32> to vector<2x1x1xf32>
    %cst_9 = arith.constant 2.560000e+02 : f32
    %18 = vector.broadcast %cst_9 : f32 to vector<2x1x1xf32>
    %19 = arith.subf %18, %17 : vector<2x1x1xf32>
    %c0_10 = arith.constant 0 : index
    %c0_11 = arith.constant 0 : index
    %c0_12 = arith.constant 0 : index
    %20 = vector.load %arg3[%c0_10, %c0_11, %c0_12] : memref<2x1x1xf32, #tpu.memory_space<vmem>>, vector<2x1x1xf32>
    tpu.vector_store %arg3[%c0_10, %c0_11, %c0_12], %19 {strides = array<i32>} : memref<2x1x1xf32, #tpu.memory_space<vmem>>, vector<2x1x1xf32>,
    return
  }
  func.func @transform_0(%arg0: i32) -> (i32, i32, i32) {
    %c0_i32 = arith.constant 0 : i32
    %c0_i32_0 = arith.constant 0 : i32
    %c0_i32_1 = arith.constant 0 : i32
    return %arg0, %c0_i32, %c0_i32_0 : i32, i32, i32
  }
  func.func @transform_1(%arg0: i32) -> (i32, i32, i32) {
    %c0_i32 = arith.constant 0 : i32
    %c0_i32_0 = arith.constant 0 : i32
    %c0_i32_1 = arith.constant 0 : i32
    return %arg0, %c0_i32, %c0_i32_0 : i32, i32, i32
  }
  func.func @transform_2(%arg0: i32) -> (i32, i32, i32) {
    %c0_i32 = arith.constant 0 : i32
    %c0_i32_0 = arith.constant 0 : i32
    %c0_i32_1 = arith.constant 0 : i32
    return %arg0, %c0_i32, %c0_i32_0 : i32, i32, i32
  }
}

</mosaic_0001>

<llo_original>
// kernel: tpu_custom_call.1
$region0: #{tpu_custom_call.1}
  #allocation0 [shape = 'u32[]', space=smem, size = 0x4, offset = 0x4, fixed_abs, tag = 'smem constant byte address 0x4 - core index']
  #allocation1 [shape = 'u32[72,128]{1,0:T(1,128)}', space=vmem, size = 0x9000, scoped, tag = 'internal scratch']
  %s0 = inlined_call_operand.hbm [shape: f32[2,4,256], index: 0, kind: input, shape index: {}]
  %s1 = inlined_call_operand.hbm [shape: f32[2,4,256], index: 1, kind: input, shape index: {}]
  %s2 = inlined_call_operand.vmem [shape: f32[2,1,1], index: 2, kind: output, shape index: {}]
  %s3 = sld [smem:[#allocation0]]
  $region26: #{tpu_custom_call.1} parent=0
    _
  %s5 = ssub.s32 1, %s3
  %s6 = scalar_select 0, %s5, %s3
  $region1: #{tpu_custom_call.1} parent=0
    #allocation2 [shape = 'u8[8192]{0}', space=vmem, size = 0x2000, scoped, tag = 'input window, operand 0, single buffered']
    #allocation3 [shape = 's32[1]{0}', space=sflag, size = 0x4, scoped, tag = 'scoped memory for tpu_custom_call.1']
    #allocation4 [shape = 'u8[8192]{0}', space=vmem, size = 0x2000, scoped, tag = 'input window, operand 1, single buffered']
    #allocation5 [shape = 's32[1]{0}', space=sflag, size = 0x4, scoped, tag = 'scoped memory for tpu_custom_call.1']
    %7 = vsyncpa [#allocation3], 0
    %8 = vsyncpa [#allocation5], 0
    // Predicated region
    $region2: #{tpu_custom_call.1} parent=1 // pred_check
      _
    $region3: #{tpu_custom_call.1} parent=1 // pred_check_branch
      %10 = sbr.rel (0) target = $region5
    $region4: #{tpu_custom_call.1} parent=1 // pred_region
      %12 = vsyncadd [#allocation3], 0
      %s13 = sshll.u32 %s0, 4
      %s14 = int_to_ptr.hbm [resolvable:$true] %s13
      %s15 = sshll.u32 [#allocation2], 4
      %s16 = int_to_ptr.vmem [resolvable:$true] %s15
      %21 = dma.hbm_to_vmem [thread:$0]  %s14, 256, %s16, [#allocation3], 128, 128, 8
    $region5: #{tpu_custom_call.1} parent=1 // pred_fallthru
      _
    // Predicated region
    $region6: #{tpu_custom_call.1} parent=1 // pred_check
      _
    $region7: #{tpu_custom_call.1} parent=1 // pred_check_branch
      %23 = sbr.rel (0) target = $region9
    $region8: #{tpu_custom_call.1} parent=1 // pred_region
      %25 = vsyncadd [#allocation5], 0
      %s26 = sshll.u32 %s1, 4
      %s27 = int_to_ptr.hbm [resolvable:$true] %s26
      %s28 = sshll.u32 [#allocation4], 4
      %s29 = int_to_ptr.vmem [resolvable:$true] %s28
      %34 = dma.hbm_to_vmem [thread:$0]  %s27, 256, %s29, [#allocation5], 128, 128, 8
    $region9: #{tpu_custom_call.1} parent=1 // pred_fallthru
      _
    // Predicated region
    $region10: #{tpu_custom_call.1} parent=1 // pred_check
      _
    $region11: #{tpu_custom_call.1} parent=1 // pred_check_branch
      %36 = sbr.rel (0) target = $region13
    $region12: #{tpu_custom_call.1} parent=1 // pred_region
      %38 = dma.done [#allocation3], 256
    $region13: #{tpu_custom_call.1} parent=1 // pred_fallthru
      _
    // Predicated region
    $region14: #{tpu_custom_call.1} parent=1 // pred_check
      _
    $region15: #{tpu_custom_call.1} parent=1 // pred_check_branch
      %40 = sbr.rel (0) target = $region17
    $region16: #{tpu_custom_call.1} parent=1 // pred_region
      %42 = dma.done [#allocation5], 256
    $region17: #{tpu_custom_call.1} parent=1 // pred_fallthru
      _
    %v43 = vld [vmem:[#allocation2] sm:$0xff]
    %v44 = vld [vmem:[#allocation2 + $0x8] sm:$0xff]
    %v45 = vld [vmem:[#allocation4] sm:$0xff]
    %v46 = vld [vmem:[#allocation4 + $0x8] sm:$0xff]
    %v47 = vmul.f32 %v43, %v45
    %v48 = vmul.f32 %v44, %v46
    %51 = vst [vmem:[#allocation1] ss:$2 sm:$0xff] %v47
    %v52 = vld.sshfl [vmem:[#allocation1] sm:$0xff pattern:$0x75316420]
    %v53 = vld.sshfl [vmem:[#allocation1 + $0x8] sm:$0xff pattern:$0x75316420]
    %s54 = scalar_lea.vmem [#allocation1], 16
    %55 = vst [vmem:[%s54] ss:$2 sm:$0xff] %v48
    %v56 = vld.sshfl [vmem:[#allocation1 + $0x10] sm:$0xff pattern:$0x75316420]
    %v57 = vld.sshfl [vmem:[#allocation1 + $0x18] sm:$0xff pattern:$0x75316420]
    %vm62 = vcmask 1043456
    %v63 = vsel %vm62, %v52, 0.0
    %v64 = vrot.slane %v63, 4
    %v65 = vadd.f32 %v63, %v64
    %v66 = vrot.slane %v65, 2
    %v67 = vadd.f32 %v65, %v66
    %v68 = vrot.slane %v67, 1
    %v69 = vadd.f32 %v67, %v68
    %v70 = vsel %vm62, %v53, 0.0
    %v71 = vrot.slane %v70, 4
    %v72 = vadd.f32 %v70, %v71
    %v73 = vrot.slane %v72, 2
    %v74 = vadd.f32 %v72, %v73
    %v75 = vrot.slane %v74, 1
    %v76 = vadd.f32 %v74, %v75
    %v77 = vsel %vm62, %v56, 0.0
    %v78 = vrot.slane %v77, 4
    %v79 = vadd.f32 %v77, %v78
    %v80 = vrot.slane %v79, 2
    %v81 = vadd.f32 %v79, %v80
    %v82 = vrot.slane %v81, 1
    %v83 = vadd.f32 %v81, %v82
    %v84 = vsel %vm62, %v57, 0.0
    %v85 = vrot.slane %v84, 4
    %v86 = vadd.f32 %v84, %v85
    %v87 = vrot.slane %v86, 2
    %v88 = vadd.f32 %v86, %v87
    %v89 = vrot.slane %v88, 1
    %v90 = vadd.f32 %v88, %v89
    %v91 = vmul.f32 %v43, %v43
    %v92 = vmul.f32 %v44, %v44
    %95 = vst [vmem:[#allocation1] ss:$2 sm:$0xff] %v91
    %v96 = vld.sshfl [vmem:[#allocation1] sm:$0xff pattern:$0x75316420]
    %v97 = vld.sshfl [vmem:[#allocation1 + $0x8] sm:$0xff pattern:$0x75316420]
    %s98 = scalar_lea.vmem [#allocation1], 16
    %99 = vst [vmem:[%s98] ss:$2 sm:$0xff] %v92
    %v100 = vld.sshfl [vmem:[#allocation1 + $0x10] sm:$0xff pattern:$0x75316420]
    %v101 = vld.sshfl [vmem:[#allocation1 + $0x18] sm:$0xff pattern:$0x75316420]
    %v106 = vsel %vm62, %v96, 0.0
    %v107 = vrot.slane %v106, 4
    %v108 = vadd.f32 %v106, %v107
    %v109 = vrot.slane %v108, 2
    %v110 = vadd.f32 %v108, %v109
    %v111 = vrot.slane %v110, 1
    %v112 = vadd.f32 %v110, %v111
    %v113 = vsel %vm62, %v97, 0.0
    %v114 = vrot.slane %v113, 4
    %v115 = vadd.f32 %v113, %v114
    %v116 = vrot.slane %v115, 2
    %v117 = vadd.f32 %v115, %v116
    %v118 = vrot.slane %v117, 1
    %v119 = vadd.f32 %v117, %v118
    %v120 = vsel %vm62, %v100, 0.0
    %v121 = vrot.slane %v120, 4
    %v122 = vadd.f32 %v120, %v121
    %v123 = vrot.slane %v122, 2
    %v124 = vadd.f32 %v122, %v123
    %v125 = vrot.slane %v124, 1
    %v126 = vadd.f32 %v124, %v125
    %v127 = vsel %vm62, %v101, 0.0
    %v128 = vrot.slane %v127, 4
    %v129 = vadd.f32 %v127, %v128
    %v130 = vrot.slane %v129, 2
    %v131 = vadd.f32 %v129, %v130
    %v132 = vrot.slane %v131, 1
    %v133 = vadd.f32 %v131, %v132
    %v134 = vmul.f32 %v45, %v45
    %v135 = vmul.f32 %v46, %v46
    %138 = vst [vmem:[#allocation1] ss:$2 sm:$0xff] %v134
    %v139 = vld.sshfl [vmem:[#allocation1] sm:$0xff pattern:$0x75316420]
    %v140 = vld.sshfl [vmem:[#allocation1 + $0x8] sm:$0xff pattern:$0x75316420]
    %s141 = scalar_lea.vmem [#allocation1], 16
    %142 = vst [vmem:[%s141] ss:$2 sm:$0xff] %v135
    %v143 = vld.sshfl [vmem:[#allocation1 + $0x10] sm:$0xff pattern:$0x75316420]
    %v144 = vld.sshfl [vmem:[#allocation1 + $0x18] sm:$0xff pattern:$0x75316420]
    %v149 = vsel %vm62, %v139, 0.0
    %v150 = vrot.slane %v149, 4
    %v151 = vadd.f32 %v149, %v150
    %v152 = vrot.slane %v151, 2
    %v153 = vadd.f32 %v151, %v152
    %v154 = vrot.slane %v153, 1
    %v155 = vadd.f32 %v153, %v154
    %v156 = vsel %vm62, %v140, 0.0
    %v157 = vrot.slane %v156, 4
    %v158 = vadd.f32 %v156, %v157
    %v159 = vrot.slane %v158, 2
    %v160 = vadd.f32 %v158, %v159
    %v161 = vrot.slane %v160, 1
    %v162 = vadd.f32 %v160, %v161
    %v163 = vsel %vm62, %v143, 0.0
    %v164 = vrot.slane %v163, 4
    %v165 = vadd.f32 %v163, %v164
    %v166 = vrot.slane %v165, 2
    %v167 = vadd.f32 %v165, %v166
    %v168 = vrot.slane %v167, 1
    %v169 = vadd.f32 %v167, %v168
    %v170 = vsel %vm62, %v144, 0.0
    %v171 = vrot.slane %v170, 4
    %v172 = vadd.f32 %v170, %v171
    %v173 = vrot.slane %v172, 2
    %v174 = vadd.f32 %v172, %v173
    %v175 = vrot.slane %v174, 1
    %v176 = vadd.f32 %v174, %v175
    %v177 = vmul.f32 %v112, %v155
    %v178 = vmul.f32 %v119, %v162
    %v179 = vmul.f32 %v126, %v169
    %v180 = vmul.f32 %v133, %v176
    %v181 = vmax.f32 %v177, 1e-16
    %v182 = vmax.f32 %v178, 1e-16
    %v183 = vmax.f32 %v179, 1e-16
    %v184 = vmax.f32 %v180, 1e-16
    %v185 = vrsqrt.pop %v181
    %v186 = vmul.f32 %v185, %v181
    %v187 = vmul.f32 %v186, %v185
    %v188 = vmul.f32 0.5, %v187
    %v189 = vsub.f32 1.5, %v188
    %v190 = vmul.f32 %v185, %v189
    %vm191 = vweird.f32 %v181
    %vm192 = vweird.f32 %v185
    %vm193 = vmor %vm191, %vm192
    %v194 = vsel %vm193, %v185, %v190
    %v195 = vrsqrt.pop %v182
    %v196 = vmul.f32 %v195, %v182
    %v197 = vmul.f32 %v196, %v195
    %v198 = vmul.f32 0.5, %v197
    %v199 = vsub.f32 1.5, %v198
    %v200 = vmul.f32 %v195, %v199
    %vm201 = vweird.f32 %v182
    %vm202 = vweird.f32 %v195
    %vm203 = vmor %vm201, %vm202
    %v204 = vsel %vm203, %v195, %v200
    %v205 = vrsqrt.pop %v183
    %v206 = vmul.f32 %v205, %v183
    %v207 = vmul.f32 %v206, %v205
    %v208 = vmul.f32 0.5, %v207
    %v209 = vsub.f32 1.5, %v208
    %v210 = vmul.f32 %v205, %v209
    %vm211 = vweird.f32 %v183
    %vm212 = vweird.f32 %v205
    %vm213 = vmor %vm211, %vm212
    %v214 = vsel %vm213, %v205, %v210
    %v215 = vrsqrt.pop %v184
    %v216 = vmul.f32 %v215, %v184
    %v217 = vmul.f32 %v216, %v215
    %v218 = vmul.f32 0.5, %v217
    %v219 = vsub.f32 1.5, %v218
    %v220 = vmul.f32 %v215, %v219
    %vm221 = vweird.f32 %v184
    %vm222 = vweird.f32 %v215
    %vm223 = vmor %vm221, %vm222
    %v224 = vsel %vm223, %v215, %v220
    %v225 = vmul.f32 %v69, %v194
    %v226 = vmul.f32 %v76, %v204
    %v227 = vmul.f32 %v83, %v214
    %v228 = vmul.f32 %v90, %v224
    %v229 = vadd.f32 %v225, %v226
    %230 = vadd.xlane.f32.xlu0 %v229
    %v231 = vpop.xlane.xlu0 %230
    %v232 = vadd.f32 %v227, %v228
    %233 = vadd.xlane.f32.xlu0 %v232
    %v234 = vpop.xlane.xlu0 %233
    %v235 = vsub.f32 256.0, %v231
    %v236 = vsub.f32 256.0, %v234
    %vm237 = vcmask 0
    %238 = vst.msk [vmem:[%s2] sm:$0x1] %vm237, %v235
    %239 = vst.msk [vmem:[%s2 + $0x1] sm:$0x1] %vm237, %v236
    // Predicated region
    $region18: #{tpu_custom_call.1} parent=1 // pred_check
      _
    $region19: #{tpu_custom_call.1} parent=1 // pred_check_branch
      %241 = sbr.rel (0) target = $region21
    $region20: #{tpu_custom_call.1} parent=1 // pred_region
      _
    $region21: #{tpu_custom_call.1} parent=1 // pred_fallthru
      _
    // Predicated region
    $region22: #{tpu_custom_call.1} parent=1 // pred_check
      _
    $region23: #{tpu_custom_call.1} parent=1 // pred_check_branch
      %243 = sbr.rel (0) target = $region25
    $region24: #{tpu_custom_call.1} parent=1 // pred_region
      _
    $region25: #{tpu_custom_call.1} parent=1 // pred_fallthru
      _
    %244 = vsyncpa [#allocation3], 1
    %245 = vsyncpa [#allocation5], 1

</llo_original>
